<compile_context>
chip_gen: v7x
topology: tpu7x:2x2x1
jax: 0.10.0
libtpu: 0.0.40
codegen_flags: <defaults>
</compile_context>

<pallas_src>
import functools

import jax
import jax.numpy as jnp
from jax.experimental import pallas as pl
from jax.experimental.pallas import tpu as pltpu


def _rmsnorm_kernel(x_ref, w_ref, o_ref, *, eps):
    # x_ref: (ROW_TILE, D) input block
    # w_ref: (1, D) weight (constant block index -> stays resident in VMEM)
    # o_ref: (ROW_TILE, D) output block
    x = x_ref[...]
    xf = x.astype(jnp.float32)                               # x.float()
    ms = jnp.mean(xf * xf, axis=-1, keepdims=True)           # mean(x^2, -1, keepdim)
    normed = (xf * jax.lax.rsqrt(ms + eps)).astype(x.dtype)  # .type_as(x)
    # normed (x.dtype) * weight; final cast picks the requested output dtype
    # (f32 for PyTorch-parity promotion, x.dtype for the fast path).
    o_ref[...] = (normed * w_ref[...]).astype(o_ref.dtype)


def _vmem_capacity_bytes():
    """Physical VMEM per TensorCore; conservative fallback if unqueryable."""
    try:
        info = pltpu.get_tpu_info()
        cap = int(getattr(info, "vmem_capacity_bytes", 0) or 0)
        if cap > 0:
            return cap
    except Exception:
        pass
    return 64 * 1024 * 1024  # v7x per-TC VMEM (smallest of the targets)


def _sublane_base(in_bytes):
    # Sublane packing granularity for the input dtype (f32:8, bf16:16, int8/fp8:32).
    return {1: 32, 2: 16}.get(in_bytes, 8)


def _per_row_bytes(dim, in_bytes, out_bytes, n_in_bufs):
    # n_in_bufs x input + 2x output (pipeline buffers) + ~8 B/elem of live f32
    # temporaries (x.float() held across the lane reduction, plus transients).
    return dim * (n_in_bufs * in_bytes + 2 * out_bytes + 8)


def _choose_row_tile(rows, dim, in_bytes, out_bytes, budget, n_in_bufs):
    """Largest row tile whose pipelined footprint stays under `budget`."""
    base = _sublane_base(in_bytes)
    per_row = _per_row_bytes(dim, in_bytes, out_bytes, n_in_bufs)
    tile = (budget // max(per_row, 1)) // base * base
    tile = max(base, min(tile, 8192))  # generous ceiling; budget is the real bound
    if rows <= tile:
        tile = rows  # block == full array extent along rows: always legal
    return tile


def rmsnorm(x, weight, eps=1e-6, row_tile=None, promote_output=True,
            input_buffers=None):
    """RMSNorm over the last axis of x, elementwise scale by weight ([dim]).

    promote_output=True  -> PyTorch parity: out dtype = result_type(x, weight).
    promote_output=False -> fast path: out dtype = x.dtype (halves write
                            traffic for bf16 activations with f32 weights).
    input_buffers        -> optional pipeline depth for the input BlockSpec
                            (e.g. 3 on v7x); None keeps the default (2).
    """
    orig_shape = x.shape
    dim = orig_shape[-1]
    assert weight.shape == (dim,)

    rows = 1
    for s in orig_shape[:-1]:
        rows *= s
    x2d = x.reshape(rows, dim)
    w2d = weight.reshape(1, dim)

    out_dtype = jnp.result_type(x.dtype, weight.dtype) if promote_output else x.dtype

    in_bytes = jnp.dtype(x.dtype).itemsize
    out_bytes = jnp.dtype(out_dtype).itemsize
    n_in_bufs = int(input_buffers) if input_buffers is not None else 2
    n_in_bufs = max(n_in_bufs, 2)

    # Generation-aware budget: ~60% of physical per-core VMEM.
    vmem_cap = _vmem_capacity_bytes()
    budget = int(vmem_cap * 0.6)

    max_tile = _choose_row_tile(rows, dim, in_bytes, out_bytes, budget, n_in_bufs)
    if row_tile is None:
        row_tile = max_tile
    else:
        base = _sublane_base(in_bytes)
        row_tile = min(int(row_tile), rows)
        if row_tile < rows:
            row_tile = max(base, (row_tile // base) * base)
        row_tile = min(row_tile, max_tile)  # never exceed the VMEM budget

    # Scoped-VMEM limit: actual tile footprint + slack, capped below physical
    # VMEM with headroom for compiler scratch / semaphores / pipeline slack.
    tile_bytes = row_tile * _per_row_bytes(dim, in_bytes, out_bytes, n_in_bufs)
    vmem_limit = int(min(max(tile_bytes + (4 << 20), 16 << 20),
                         vmem_cap - (8 << 20)))

    grid = (pl.cdiv(rows, row_tile),)

    in_spec_kwargs = {}
    if input_buffers is not None and n_in_bufs != 2:
        in_spec_kwargs["pipeline_mode"] = pl.Buffered(n_in_bufs)
    x_spec = pl.BlockSpec((row_tile, dim), lambda i: (i, 0), **in_spec_kwargs)
    w_spec = pl.BlockSpec((1, dim), lambda i: (0, 0))  # constant index: resident

    out = pl.pallas_call(
        functools.partial(_rmsnorm_kernel, eps=eps),
        out_shape=jax.ShapeDtypeStruct((rows, dim), out_dtype),
        grid_spec=pltpu.PrefetchScalarGridSpec(
            num_scalar_prefetch=0,
            grid=grid,
            in_specs=[x_spec, w_spec],
            out_specs=pl.BlockSpec((row_tile, dim), lambda i: (i, 0)),
        ),
        compiler_params=pltpu.CompilerParams(
            dimension_semantics=("parallel",),
            vmem_limit_bytes=vmem_limit,
        ),
    )(x2d, w2d)

    return out.reshape(orig_shape[:-1] + (dim,))


def rmsnorm_reference(x, weight, eps=1e-6):
    xf = x.astype(jnp.float32)
    normed = (xf * jax.lax.rsqrt(
        jnp.mean(xf * xf, axis=-1, keepdims=True) + eps)).astype(x.dtype)
    return normed * weight


if __name__ == "__main__":
    key = jax.random.PRNGKey(0)
    batch, seq, dim = 2, 8, 32

    # f32 input, f32 weight (nn.Parameter(torch.ones(dim)) -> ones init).
    # Note: dim=32 (<128) exercises the masked-store path; fine for a
    # correctness check, real transformer dims should be lane-dense.
    x = jax.random.normal(key, (batch, seq, dim), dtype=jnp.float32)
    weight = jnp.ones((dim,), dtype=jnp.float32)

    out = jax.block_until_ready(rmsnorm(x, weight, eps=1e-6))
    ref = rmsnorm_reference(x, weight, eps=1e-6)
    assert out.shape == x.shape, (out.shape, x.shape)
    assert out.dtype == ref.dtype, (out.dtype, ref.dtype)
    assert jnp.allclose(out, ref, atol=1e-5, rtol=1e-5), "f32 mismatch vs reference"

    # bf16 input, f32 weight: default path promotes to f32 output, matching
    # PyTorch's `normed.type_as(x) * float32 weight`.
    xb = x.astype(jnp.bfloat16)
    outb = jax.block_until_ready(rmsnorm(xb, weight, eps=1e-6))
    refb = rmsnorm_reference(xb, weight, eps=1e-6)
    assert outb.dtype == jnp.float32, outb.dtype
    assert jnp.allclose(outb, refb, atol=2e-2, rtol=2e-2), "bf16 mismatch vs reference"

    # Fast path: bf16 output (promote_output=False) halves HBM write traffic.
    outb16 = jax.block_until_ready(rmsnorm(xb, weight, eps=1e-6, promote_output=False))
    assert outb16.dtype == jnp.bfloat16, outb16.dtype
    assert jnp.allclose(outb16.astype(jnp.float32), refb, atol=3e-2, rtol=3e-2), \
        "bf16-out fast path mismatch vs reference"

    print("KERNEL_OK")
</pallas_src>

<mosaic_0001>
module attributes {stable_mosaic.version = 11 : i64} {
  func.func @_rmsnorm_kernel(%arg0: i32, %arg1: memref<16x32xf32, #tpu.memory_space<vmem>>, %arg2: memref<1x32xf32, #tpu.memory_space<vmem>>, %arg3: memref<16x32xf32, #tpu.memory_space<vmem>>) attributes {dimension_semantics = [#tpu.dimension_semantics<parallel>], iteration_bounds = array<i64: 1>, scalar_prefetch = 0 : i64, scratch_operands = 0 : i64, tpu.core_type = #tpu.core_type<tc>, window_params = [{transform_indices = @transform_0, window_bounds = array<i64: 16, 32>}, {pipeline_mode = #tpu.pipeline_mode<synchronous>, transform_indices = @transform_1, window_bounds = array<i64: 1, 32>}, {transform_indices = @transform_2, window_bounds = array<i64: 16, 32>}]} {
    %c0 = arith.constant 0 : index
    %c0_0 = arith.constant 0 : index
    %0 = vector.load %arg1[%c0, %c0_0] : memref<16x32xf32, #tpu.memory_space<vmem>>, vector<16x32xf32>
    %1 = arith.mulf %0, %0 : vector<16x32xf32>
    %cst = arith.constant dense<0.000000e+00> : vector<16xf32>
    %2 = vector.multi_reduction <add>, %1, %cst [1] : vector<16x32xf32> to vector<16xf32>
    %3 = vector.shape_cast %2 : vector<16xf32> to vector<16x1xf32>
    %cst_1 = arith.constant 3.200000e+01 : f32
    %4 = vector.broadcast %cst_1 : f32 to vector<16x1xf32>
    %5 = arith.divf %3, %4 : vector<16x1xf32>
    %cst_2 = arith.constant 9.99999997E-7 : f32
    %6 = vector.broadcast %cst_2 : f32 to vector<16x1xf32>
    %7 = arith.addf %5, %6 : vector<16x1xf32>
    %8 = math.rsqrt %7 : vector<16x1xf32>
    %9 = vector.broadcast %8 : vector<16x1xf32> to vector<16x32xf32>
    %10 = arith.mulf %0, %9 : vector<16x32xf32>
    %c0_3 = arith.constant 0 : index
    %c0_4 = arith.constant 0 : index
    %11 = vector.load %arg2[%c0_3, %c0_4] : memref<1x32xf32, #tpu.memory_space<vmem>>, vector<1x32xf32>
    %12 = vector.broadcast %11 : vector<1x32xf32> to vector<16x32xf32>
    %13 = arith.mulf %10, %12 : vector<16x32xf32>
    %c0_5 = arith.constant 0 : index
    %c0_6 = arith.constant 0 : index
    %14 = vector.load %arg3[%c0_5, %c0_6] : memref<16x32xf32, #tpu.memory_space<vmem>>, vector<16x32xf32>
    tpu.vector_store %arg3[%c0_5, %c0_6], %13 {strides = array<i32>} : memref<16x32xf32, #tpu.memory_space<vmem>>, vector<16x32xf32>,
    return
  }
  func.func @transform_0(%arg0: i32) -> (i32, i32) {
    %c0_i32 = arith.constant 0 : i32
    %c0_i32_0 = arith.constant 0 : i32
    return %arg0, %c0_i32 : i32, i32
  }
  func.func @transform_1(%arg0: i32) -> (i32, i32) {
    %c0_i32 = arith.constant 0 : i32
    %c0_i32_0 = arith.constant 0 : i32
    %c0_i32_1 = arith.constant 0 : i32
    return %c0_i32, %c0_i32_0 : i32, i32
  }
  func.func @transform_2(%arg0: i32) -> (i32, i32) {
    %c0_i32 = arith.constant 0 : i32
    %c0_i32_0 = arith.constant 0 : i32
    return %arg0, %c0_i32 : i32, i32
  }
}

</mosaic_0001>

<llo_original>
// kernel: tpu_custom_call.1
$region0: #{tpu_custom_call.1}
  #allocation0 [shape = 'u32[]', space=smem, size = 0x4, offset = 0x4, fixed_abs, tag = 'smem constant byte address 0x4 - core index']
  #allocation1 [shape = 'u32[144,128]{1,0:T(1,128)}', space=vmem, size = 0x12000, scoped, tag = 'internal scratch']
  %s0 = inlined_call_operand.hbm [shape: f32[16,32], index: 0, kind: input, shape index: {}]
  %s1 = inlined_call_operand.vmem [shape: f32[1,32], index: 1, kind: input, shape index: {}]
  %s2 = inlined_call_operand.hbm [shape: f32[16,32], index: 2, kind: output, shape index: {}]
  %s3 = sld [smem:[#allocation0]]
  $region22: #{tpu_custom_call.1} parent=0
    _
  %s5 = ssub.s32 1, %s3
  %s6 = scalar_select 0, %s5, %s3
  $region1: #{tpu_custom_call.1} parent=0
    #allocation2 [shape = 'u8[8192]{0}', space=vmem, size = 0x2000, scoped, tag = 'input window, operand 0, single buffered']
    #allocation3 [shape = 's32[1]{0}', space=sflag, size = 0x4, scoped, tag = 'scoped memory for tpu_custom_call.1']
    #allocation4 [shape = 's32[1]{0}', space=sflag, size = 0x4, scoped, tag = 'scoped memory for tpu_custom_call.1']
    #allocation5 [shape = 'u8[8192]{0}', space=vmem, size = 0x2000, scoped, tag = 'output window, operand 0, single buffered']
    %7 = vsyncpa [#allocation3], 0
    %8 = vsyncpa [#allocation4], 0
    // Predicated region
    $region2: #{tpu_custom_call.1} parent=1 // pred_check
      _
    $region3: #{tpu_custom_call.1} parent=1 // pred_check_branch
      %10 = sbr.rel (0) target = $region5
    $region4: #{tpu_custom_call.1} parent=1 // pred_region
      %s12 = ssub.s32 256, 256
      %13 = vsyncadd [#allocation3], %s12
      %s14 = sshll.u32 [#allocation2], 4
      %s15 = int_to_ptr.vmem [resolvable:$true] %s14
      %20 = dma.hbm_to_vmem [thread:$0]  %s0, 256, %s15, [#allocation3], 128, 128, 8
    $region5: #{tpu_custom_call.1} parent=1 // pred_fallthru
      _
    // Predicated region
    $region6: #{tpu_custom_call.1} parent=1 // pred_check
      _
    $region7: #{tpu_custom_call.1} parent=1 // pred_check_branch
      %22 = sbr.rel (0) target = $region9
    $region8: #{tpu_custom_call.1} parent=1 // pred_region
      _
    $region9: #{tpu_custom_call.1} parent=1 // pred_fallthru
      _
    // Predicated region
    $region10: #{tpu_custom_call.1} parent=1 // pred_check
      _
    $region11: #{tpu_custom_call.1} parent=1 // pred_check_branch
      %24 = sbr.rel (0) target = $region13
    $region12: #{tpu_custom_call.1} parent=1 // pred_region
      %25 = dma.done [#allocation3], 256
    $region13: #{tpu_custom_call.1} parent=1 // pred_fallthru
      _
    %v26 = vld [vmem:[#allocation2] sm:$0xff]
    %v27 = vld [vmem:[#allocation2 + $0x8] sm:$0xff]
    %v28 = vmul.f32 %v26, %v26
    %v29 = vmul.f32 %v27, %v27
    %vm30 = vcmask 261120
    %v31 = vsel %vm30, %v28, 0.0
    %32 = vadd.xlane.f32.xlu0 %v31
    %v33 = vpop.xlane.xlu0 %32
    %v34 = vsel %vm30, %v29, 0.0
    %35 = vadd.xlane.f32.xlu0 %v34
    %v36 = vpop.xlane.xlu0 %35
    %v37 = vrcp.pop 32.0
    %v38 = vmul.f32 %v33, %v37
    %v39 = vmul.f32 %v36, %v37
    %v40 = vadd.f32 %v38, 1e-06
    %v41 = vadd.f32 %v39, 1e-06
    %v42 = vrsqrt.pop %v40
    %v43 = vrsqrt.pop %v41
    %v44 = vmul.f32 %v26, %v42
    %v45 = vmul.f32 %v27, %v43
    %v46 = vld [vmem:[%s1] sm:$0x1]
    %v48 = vlaneseq
    %v49 = vshrl.u32 %v48, 7
    %v50 = vsub.s32 0, %v49
    %v51 = vrot.slane %v46, %v50
    %v53 = vmul.f32 %v44, %v51
    %v54 = vmul.f32 %v45, %v51
    %55 = vst.msk [vmem:[#allocation5] sm:$0xff] %vm30, %v53
    %56 = vst.msk [vmem:[#allocation5 + $0x8] sm:$0xff] %vm30, %v54
    // Predicated region
    $region14: #{tpu_custom_call.1} parent=1 // pred_check
      _
    $region15: #{tpu_custom_call.1} parent=1 // pred_check_branch
      %58 = sbr.rel (0) target = $region17
    $region16: #{tpu_custom_call.1} parent=1 // pred_region
      %s60 = ssub.s32 256, 256
      %61 = vsyncadd [#allocation4], %s60
      %s62 = sshll.u32 [#allocation5], 4
      %s63 = int_to_ptr.vmem [resolvable:$true] %s62
      %68 = dma.vmem_to_hbm [thread:$0]  %s63, 256, %s2, [#allocation4], 128, 128, 8
    $region17: #{tpu_custom_call.1} parent=1 // pred_fallthru
      _
    // Predicated region
    $region18: #{tpu_custom_call.1} parent=1 // pred_check
      _
    $region19: #{tpu_custom_call.1} parent=1 // pred_check_branch
      %70 = sbr.rel (0) target = $region21
    $region20: #{tpu_custom_call.1} parent=1 // pred_region
      %71 = dma.done [#allocation4], 256
    $region21: #{tpu_custom_call.1} parent=1 // pred_fallthru
      _
    %72 = vsyncpa [#allocation3], 1
    %73 = vsyncpa [#allocation4], 1

</llo_original>
